<compile_context>
chip_gen: v5e
topology: v5e:2x2
jax: 0.10.0
libtpu: 0.0.40
codegen_flags: <defaults>
</compile_context>

<pallas_src>
import jax
import jax.numpy as jnp
from jax import lax
from jax.experimental import pallas as pl
from jax.experimental.pallas import tpu as pltpu


# Conservative budgets that are legal on every generation
# (scoped VMEM defaults: 16 MiB v5e, 32 MiB v6e/v7x; v7x physical is 64 MiB).
_VMEM_TILE_BUDGET_BYTES = 24 * 1024 * 1024
_VMEM_LIMIT_BYTES = 32 * 1024 * 1024


def _choose_s_tile(S: int, N: int, H: int, itemsize: int) -> int:
    """Largest S_TILE whose double-buffered input block + f32 acc fits budget."""
    acc_bytes = N * H * 4                       # f32 accumulator / output block
    row_bytes = N * H * itemsize                # one sequence step
    avail = max(_VMEM_TILE_BUDGET_BYTES - acc_bytes, row_bytes)
    s_tile = max(1, avail // (2 * row_bytes))   # 2x for input double-buffering
    return int(min(S, s_tile))


def _make_mean0_kernel(S: int, s_tile: int, inv_s: float, acc_in_out: bool):
    """Build the reduction kernel. acc_in_out: accumulate directly in out_ref."""
    mask_tail = (S % s_tile) != 0               # static: last block is partial?

    def kernel(seq_ref, out_ref, *scratch):
        acc_ref = out_ref if acc_in_out else scratch[0]
        s = pl.program_id(0)
        last = pl.num_programs(0) - 1

        # (s_tile, N, H) block -> f32, mask padded tail rows, reduce over S.
        tile = seq_ref[...].astype(jnp.float32)
        if mask_tail:
            valid = S - s * s_tile
            row = lax.broadcasted_iota(jnp.int32, tile.shape, 0)
            tile = jnp.where(row < valid, tile, 0.0)
        partial = jnp.sum(tile, axis=0)          # one partial sum per grid step

        @pl.when(s == 0)
        def _():
            acc_ref[...] = partial               # init (no zero pre-pass)

        @pl.when(s != 0)
        def _():
            acc_ref[...] += partial              # single RMW per grid step

        @pl.when(s == last)
        def _():
            out_ref[...] = (acc_ref[...] * inv_s).astype(out_ref.dtype)

    return kernel


def readout(seq: jax.Array) -> jax.Array:
    """Mean over axis 0 of a (S, N, H) array via a Pallas TPU kernel."""
    S, N, H = seq.shape
    out_dtype = seq.dtype
    acc_in_out = jnp.dtype(out_dtype) == jnp.dtype(jnp.float32)

    s_tile = _choose_s_tile(S, N, H, jnp.dtype(seq.dtype).itemsize)
    grid = (pl.cdiv(S, s_tile),)
    inv_s = 1.0 / float(S)                       # static immediate

    kernel = _make_mean0_kernel(S, s_tile, inv_s, acc_in_out)
    scratch_shapes = [] if acc_in_out else [pltpu.VMEM((N, H), jnp.float32)]

    return pl.pallas_call(
        kernel,
        out_shape=jax.ShapeDtypeStruct((N, H), out_dtype),
        grid_spec=pltpu.PrefetchScalarGridSpec(
            num_scalar_prefetch=0,
            grid=grid,
            in_specs=[pl.BlockSpec((s_tile, N, H), lambda s: (s, 0, 0))],
            out_specs=pl.BlockSpec((N, H), lambda s: (0, 0)),
            scratch_shapes=scratch_shapes,
        ),
        compiler_params=pltpu.CompilerParams(
            dimension_semantics=("arbitrary",),  # S is the reduction axis
            vmem_limit_bytes=_VMEM_LIMIT_BYTES,
        ),
    )(seq)


if __name__ == "__main__":
    key = jax.random.PRNGKey(0)
    # seq: (S=8 sequence steps, N=16 nodes, H=128 hidden)
    seq = jax.random.normal(key, (8, 16, 128), dtype=jnp.float32)

    out = readout(seq)
    out = jax.block_until_ready(out)

    ref = jnp.mean(seq, axis=0)
    assert out.shape == ref.shape == (16, 128)
    assert jnp.allclose(out, ref, atol=1e-5, rtol=1e-5)

    # Also exercise the scratch path (non-f32 output) and a partial tail block.
    seq_bf16 = jax.random.normal(key, (13, 16, 128), dtype=jnp.bfloat16)
    out_bf16 = jax.block_until_ready(readout(seq_bf16))
    ref_bf16 = jnp.mean(seq_bf16.astype(jnp.float32), axis=0).astype(jnp.bfloat16)
    assert jnp.allclose(out_bf16.astype(jnp.float32),
                        ref_bf16.astype(jnp.float32), atol=2e-2, rtol=2e-2)

    print("KERNEL_OK")
</pallas_src>

<mosaic_0001>
module attributes {stable_mosaic.version = 11 : i64} {
  func.func @kernel(%arg0: i32, %arg1: memref<8x16x128xf32, #tpu.memory_space<vmem>>, %arg2: memref<16x128xf32, #tpu.memory_space<vmem>>) attributes {dimension_semantics = [#tpu.dimension_semantics<arbitrary>], iteration_bounds = array<i64: 1>, scalar_prefetch = 0 : i64, scratch_operands = 0 : i64, tpu.core_type = #tpu.core_type<tc>, window_params = [{transform_indices = @transform_0, window_bounds = array<i64: 8, 16, 128>}, {pipeline_mode = #tpu.pipeline_mode<synchronous>, transform_indices = @transform_1, window_bounds = array<i64: 16, 128>}]} {
    %c0 = arith.constant 0 : index
    %c0_0 = arith.constant 0 : index
    %c0_1 = arith.constant 0 : index
    %0 = vector.load %arg1[%c0, %c0_0, %c0_1] : memref<8x16x128xf32, #tpu.memory_space<vmem>>, vector<8x16x128xf32>
    %cst = arith.constant dense<0.000000e+00> : vector<16x128xf32>
    %1 = vector.multi_reduction <add>, %0, %cst [0] : vector<8x16x128xf32> to vector<16x128xf32>
    %c0_i32 = arith.constant 0 : i32
    %2 = arith.cmpi eq, %arg0, %c0_i32 : i32
    %3 = arith.extui %2 : i1 to i32
    %c0_i32_2 = arith.constant 0 : i32
    %4 = arith.cmpi ne, %3, %c0_i32_2 : i32
    scf.if %4 {
      %c0_7 = arith.constant 0 : index
      %c0_8 = arith.constant 0 : index
      %11 = vector.load %arg2[%c0_7, %c0_8] : memref<16x128xf32, #tpu.memory_space<vmem>>, vector<16x128xf32>
      tpu.vector_store %arg2[%c0_7, %c0_8], %1 {strides = array<i32>} : memref<16x128xf32, #tpu.memory_space<vmem>>, vector<16x128xf32>,
    } else {
    }
    %c0_i32_3 = arith.constant 0 : i32
    %5 = arith.cmpi ne, %arg0, %c0_i32_3 : i32
    %6 = arith.extui %5 : i1 to i32
    %c0_i32_4 = arith.constant 0 : i32
    %7 = arith.cmpi ne, %6, %c0_i32_4 : i32
    scf.if %7 {
      %c0_7 = arith.constant 0 : index
      %c0_8 = arith.constant 0 : index
      %11 = vector.load %arg2[%c0_7, %c0_8] : memref<16x128xf32, #tpu.memory_space<vmem>>, vector<16x128xf32>
      %12 = arith.addf %11, %1 : vector<16x128xf32>
      %c0_9 = arith.constant 0 : index
      %c0_10 = arith.constant 0 : index
      %13 = vector.load %arg2[%c0_9, %c0_10] : memref<16x128xf32, #tpu.memory_space<vmem>>, vector<16x128xf32>
      tpu.vector_store %arg2[%c0_9, %c0_10], %12 {strides = array<i32>} : memref<16x128xf32, #tpu.memory_space<vmem>>, vector<16x128xf32>,
    } else {
    }
    %c0_i32_5 = arith.constant 0 : i32
    %8 = arith.cmpi eq, %arg0, %c0_i32_5 : i32
    %9 = arith.extui %8 : i1 to i32
    %c0_i32_6 = arith.constant 0 : i32
    %10 = arith.cmpi ne, %9, %c0_i32_6 : i32
    scf.if %10 {
      %c0_7 = arith.constant 0 : index
      %c0_8 = arith.constant 0 : index
      %11 = vector.load %arg2[%c0_7, %c0_8] : memref<16x128xf32, #tpu.memory_space<vmem>>, vector<16x128xf32>
      %cst_9 = arith.constant 1.250000e-01 : f32
      %12 = vector.broadcast %cst_9 : f32 to vector<16x128xf32>
      %13 = arith.mulf %11, %12 : vector<16x128xf32>
      %c0_10 = arith.constant 0 : index
      %c0_11 = arith.constant 0 : index
      %14 = vector.load %arg2[%c0_10, %c0_11] : memref<16x128xf32, #tpu.memory_space<vmem>>, vector<16x128xf32>
      tpu.vector_store %arg2[%c0_10, %c0_11], %13 {strides = array<i32>} : memref<16x128xf32, #tpu.memory_space<vmem>>, vector<16x128xf32>,
    } else {
    }
    return
  }
  func.func @transform_0(%arg0: i32) -> (i32, i32, i32) {
    %c0_i32 = arith.constant 0 : i32
    %c0_i32_0 = arith.constant 0 : i32
    %c0_i32_1 = arith.constant 0 : i32
    return %arg0, %c0_i32, %c0_i32_0 : i32, i32, i32
  }
  func.func @transform_1(%arg0: i32) -> (i32, i32) {
    %c0_i32 = arith.constant 0 : i32
    %c0_i32_0 = arith.constant 0 : i32
    %c0_i32_1 = arith.constant 0 : i32
    return %c0_i32, %c0_i32_0 : i32, i32
  }
}

</mosaic_0001>

<llo_original>
// kernel: tpu_custom_call.1
$region0: #{tpu_custom_call.1}
  #allocation0 [shape = 'u32[]', space=smem, size = 0x4, offset = 0x4, fixed_abs, tag = 'smem constant byte address 0x4 - core index']
  #allocation1 [shape = 'u32[72,128]{1,0:T(1,128)}', space=vmem, size = 0x9000, scoped, tag = 'internal scratch']
  %s0 = inlined_call_operand.hbm [shape: f32[8,16,128], index: 0, kind: input, shape index: {}]
  %s1 = inlined_call_operand.hbm [shape: f32[16,128], index: 1, kind: output, shape index: {}]
  %s2 = sld [smem:[#allocation0]]
  $region30: #{tpu_custom_call.1} parent=0
    _
  %s4 = ssub.s32 1, %s2
  %s5 = scalar_select 0, %s4, %s2
  $region1: #{tpu_custom_call.1} parent=0
    #allocation2 [shape = 'u8[65536]{0}', space=vmem, size = 0x10000, scoped, tag = 'input window, operand 0, single buffered']
    #allocation3 [shape = 's32[1]{0}', space=sflag, size = 0x4, scoped, tag = 'scoped memory for tpu_custom_call.1']
    #allocation4 [shape = 's32[1]{0}', space=sflag, size = 0x4, scoped, tag = 'scoped memory for tpu_custom_call.1']
    #allocation5 [shape = 'u8[8192]{0}', space=vmem, size = 0x2000, scoped, tag = 'output window, operand 0, single buffered']
    %6 = vsyncpa [#allocation3], 0
    %7 = vsyncpa [#allocation4], 0
    // Predicated region
    $region2: #{tpu_custom_call.1} parent=1 // pred_check
      _
    $region3: #{tpu_custom_call.1} parent=1 // pred_check_branch
      %9 = sbr.rel (0) target = $region5
    $region4: #{tpu_custom_call.1} parent=1 // pred_region
      %11 = vsyncadd [#allocation3], 0
      %s12 = sshll.u32 %s0, 4
      %s13 = int_to_ptr.hbm [resolvable:$true] %s12
      %s14 = sshll.u32 [#allocation2], 4
      %s15 = int_to_ptr.vmem [resolvable:$true] %s14
      %20 = dma.hbm_to_vmem [thread:$0]  %s13, 2048, %s15, [#allocation3], 128, 128, 8
    $region5: #{tpu_custom_call.1} parent=1 // pred_fallthru
      _
    // Predicated region
    $region6: #{tpu_custom_call.1} parent=1 // pred_check
      _
    $region7: #{tpu_custom_call.1} parent=1 // pred_check_branch
      %22 = sbr.rel (0) target = $region9
    $region8: #{tpu_custom_call.1} parent=1 // pred_region
      %24 = dma.done [#allocation3], 2048
    $region9: #{tpu_custom_call.1} parent=1 // pred_fallthru
      _
    %v25 = vld [vmem:[#allocation2] sm:$0xff]
    %v26 = vld [vmem:[#allocation2 + $0x8] sm:$0xff]
    %v27 = vld [vmem:[#allocation2 + $0x10] sm:$0xff]
    %v28 = vld [vmem:[#allocation2 + $0x18] sm:$0xff]
    %v29 = vld [vmem:[#allocation2 + $0x20] sm:$0xff]
    %v30 = vld [vmem:[#allocation2 + $0x28] sm:$0xff]
    %v31 = vld [vmem:[#allocation2 + $0x30] sm:$0xff]
    %v32 = vld [vmem:[#allocation2 + $0x38] sm:$0xff]
    %v33 = vld [vmem:[#allocation2 + $0x40] sm:$0xff]
    %v34 = vld [vmem:[#allocation2 + $0x48] sm:$0xff]
    %v35 = vld [vmem:[#allocation2 + $0x50] sm:$0xff]
    %v36 = vld [vmem:[#allocation2 + $0x58] sm:$0xff]
    %v37 = vld [vmem:[#allocation2 + $0x60] sm:$0xff]
    %v38 = vld [vmem:[#allocation2 + $0x68] sm:$0xff]
    %v39 = vld [vmem:[#allocation2 + $0x70] sm:$0xff]
    %v40 = vld [vmem:[#allocation2 + $0x78] sm:$0xff]
    %v41 = vadd.f32 %v25, %v27
    %v42 = vadd.f32 %v41, %v29
    %v43 = vadd.f32 %v42, %v31
    %v44 = vadd.f32 %v43, %v33
    %v45 = vadd.f32 %v44, %v35
    %v46 = vadd.f32 %v45, %v37
    %v47 = vadd.f32 %v46, %v39
    %v48 = vadd.f32 %v26, %v28
    %v49 = vadd.f32 %v48, %v30
    %v50 = vadd.f32 %v49, %v32
    %v51 = vadd.f32 %v50, %v34
    %v52 = vadd.f32 %v51, %v36
    %v53 = vadd.f32 %v52, %v38
    %v54 = vadd.f32 %v53, %v40
    %p55 = scmp.eq.s32.totalorder 0, 0
    // Predicated region
    $region10: #{tpu_custom_call.1} parent=1 // pred_check
      %p56 = pneg %p55
    $region11: #{tpu_custom_call.1} parent=1 // pred_check_branch
      %58 = sbr.rel (%p56) target = $region13
    $region12: #{tpu_custom_call.1} parent=1 // pred_region
      %59 = vst [vmem:[#allocation5] sm:$0xff] %v47
      %60 = vst [vmem:[#allocation5 + $0x8] sm:$0xff] %v54
    $region13: #{tpu_custom_call.1} parent=1 // pred_fallthru
      _
    %p61 = scmp.ne.s32.totalorder 0, 0
    // Predicated region
    $region14: #{tpu_custom_call.1} parent=1 // pred_check
      %p62 = pneg %p61
    $region15: #{tpu_custom_call.1} parent=1 // pred_check_branch
      %64 = sbr.rel (%p62) target = $region17
    $region16: #{tpu_custom_call.1} parent=1 // pred_region
      %v65 = vld [vmem:[#allocation5] sm:$0xff]
      %v66 = vld [vmem:[#allocation5 + $0x8] sm:$0xff]
      %v67 = vadd.f32 %v65, %v47
      %v68 = vadd.f32 %v66, %v54
      %69 = vst [vmem:[#allocation5] sm:$0xff] %v67
      %70 = vst [vmem:[#allocation5 + $0x8] sm:$0xff] %v68
    $region17: #{tpu_custom_call.1} parent=1 // pred_fallthru
      _
    // Predicated region
    $region18: #{tpu_custom_call.1} parent=1 // pred_check
      %p71 = pneg %p55
    $region19: #{tpu_custom_call.1} parent=1 // pred_check_branch
      %73 = sbr.rel (%p71) target = $region21
    $region20: #{tpu_custom_call.1} parent=1 // pred_region
      %v74 = vld [vmem:[#allocation5] sm:$0xff]
      %v75 = vld [vmem:[#allocation5 + $0x8] sm:$0xff]
      %v76 = vmul.f32 %v74, 0.125
      %v77 = vmul.f32 %v75, 0.125
      %78 = vst [vmem:[#allocation5] sm:$0xff] %v76
      %79 = vst [vmem:[#allocation5 + $0x8] sm:$0xff] %v77
    $region21: #{tpu_custom_call.1} parent=1 // pred_fallthru
      _
    // Predicated region
    $region22: #{tpu_custom_call.1} parent=1 // pred_check
      _
    $region23: #{tpu_custom_call.1} parent=1 // pred_check_branch
      %81 = sbr.rel (0) target = $region25
    $region24: #{tpu_custom_call.1} parent=1 // pred_region
      %83 = vsyncadd [#allocation4], 0
      %s84 = sshll.u32 [#allocation5], 4
      %s85 = int_to_ptr.vmem [resolvable:$true] %s84
      %s86 = sshll.u32 %s1, 4
      %s87 = int_to_ptr.hbm [resolvable:$true] %s86
      %92 = dma.vmem_to_hbm [thread:$0]  %s85, 256, %s87, [#allocation4], 128, 128, 8
    $region25: #{tpu_custom_call.1} parent=1 // pred_fallthru
      _
    // Predicated region
    $region26: #{tpu_custom_call.1} parent=1 // pred_check
      _
    $region27: #{tpu_custom_call.1} parent=1 // pred_check_branch
      %94 = sbr.rel (0) target = $region29
    $region28: #{tpu_custom_call.1} parent=1 // pred_region
      %96 = dma.done [#allocation4], 256
    $region29: #{tpu_custom_call.1} parent=1 // pred_fallthru
      _
    %97 = vsyncpa [#allocation3], 1
    %98 = vsyncpa [#allocation4], 1

</llo_original>
